<compile_context>
chip_gen: v6e
topology: v6e:2x2x1
jax: 0.10.0
libtpu: 0.0.40
codegen_flags: <defaults>
</compile_context>

<pallas_src>
import functools

import jax
import jax.numpy as jnp
from jax import lax
from jax.experimental import pallas as pl
from jax.experimental.pallas import tpu as pltpu


def _upwind_kernel(p_ref, up_ref, um_ref, vp_ref, vm_ref, out_ref,
                   *, H, W, L, dx, dy):
    """One (TB, H, W*L) tile of the upwind advection trend."""
    p = p_ref[...]                                   # (TB, H, W*L) float32
    WL = W * L

    row = lax.broadcasted_iota(jnp.int32, p.shape, 1)   # h index
    col = lax.broadcasted_iota(jnp.int32, p.shape, 2)   # flattened w*L + l

    cx = jnp.float32(0.5 / dx)
    cy = jnp.float32(0.5 / dy)

    # Differences along H (sublane axis).  Wrap-around rows are exactly the
    # edge rows where replicate padding makes the diff 0, so one where each.
    p_hp1 = pltpu.roll(p, shift=H - 1, axis=1)       # p[h+1] (wrapping)
    p_hm1 = pltpu.roll(p, shift=1, axis=1)           # p[h-1] (wrapping)
    dxp = jnp.where(row == H - 1, 0.0, (p_hp1 - p) * cx)
    dxm = jnp.where(row == 0, 0.0, (p - p_hm1) * cx)

    # Differences along W: shift by L inside the flattened (W*L) lane axis.
    p_wp1 = pltpu.roll(p, shift=WL - L, axis=2)      # p[w+1] (wrapping)
    p_wm1 = pltpu.roll(p, shift=L, axis=2)           # p[w-1] (wrapping)
    dyp = jnp.where(col >= (W - 1) * L, 0.0, (p_wp1 - p) * cy)
    dym = jnp.where(col < L, 0.0, (p - p_wm1) * cy)

    out_ref[...] = (dxp * um_ref[...] - dxm * up_ref[...]
                    + dyp * vm_ref[...] - dym * vp_ref[...])


def _pick_block_batch(n, bytes_per_batch, target_bytes=1 << 20):
    """Largest divisor of n with tile <= target, keeping grid length >= 2."""
    best = 1
    for tb in range(1, n + 1):
        if n % tb != 0:
            continue
        if tb * bytes_per_batch > target_bytes:
            continue
        if n > 1 and (n // tb) < 2:
            continue                    # keep >=2 grid steps (v7x megacore)
        best = tb
    return best


def pde_upwind(inputs, dx=(1.0 / 256, 1.0 / 256)):
    """inputs: stacked array (>=5, N, C=1, H, W, L) = [p, u+, u-, v+, v-]."""
    p, u_plus, u_minus, v_plus, v_minus = (inputs[i] for i in range(5))
    N, C, H, W, L = p.shape
    assert C == 1, "PDEUpwind expects a single channel axis (C == 1)"
    WL = W * L

    # Contiguous merge of (C, W, L) minors into a lane-dense last axis: free.
    def flat(a):
        return a.reshape(N, H, WL)

    pf = flat(p)
    upf, umf = flat(u_plus), flat(u_minus)
    vpf, vmf = flat(v_plus), flat(v_minus)

    bytes_per_batch = H * WL * 4
    tb = _pick_block_batch(N, bytes_per_batch)
    grid = (N // tb,)

    kern = functools.partial(_upwind_kernel, H=H, W=W, L=L,
                             dx=float(dx[0]), dy=float(dx[1]))

    spec = pl.BlockSpec((tb, H, WL), lambda b: (b, 0, 0))

    total = N * H * WL
    cost = pl.CostEstimate(flops=15 * total,
                           transcendentals=0,
                           bytes_accessed=6 * total * 4)

    out = pl.pallas_call(
        kern,
        out_shape=jax.ShapeDtypeStruct((N, H, WL), p.dtype),
        grid=grid,
        in_specs=[spec, spec, spec, spec, spec],
        out_specs=spec,
        compiler_params=pltpu.CompilerParams(
            dimension_semantics=("parallel",),
            vmem_limit_bytes=32 * 1024 * 1024),
        cost_estimate=cost,
    )(pf, upf, umf, vpf, vmf)

    return out.reshape(N, C, H, W, L)   # free: contiguous split


def _reference(p, up, um, vp, vm, dx, dy):
    """Pure-JAX reference matching the PyTorch forward (source='none')."""
    pp = jnp.pad(p, ((0, 0), (0, 0), (1, 1), (1, 1), (0, 0)), mode="edge")
    c = pp[:, :, 1:-1, 1:-1, :]
    dxp = (pp[:, :, 2:, 1:-1, :] - c) / (2.0 * dx)
    dxm = (c - pp[:, :, :-2, 1:-1, :]) / (2.0 * dx)
    dyp = (pp[:, :, 1:-1, 2:, :] - c) / (2.0 * dy)
    dym = (c - pp[:, :, 1:-1, :-2, :]) / (2.0 * dy)
    return dxp * um - dxm * up + dyp * vm - dym * vp


if __name__ == "__main__":
    key = jax.random.PRNGKey(0)
    ks = jax.random.split(key, 5)

    N, C, H, W, L = 4, 1, 16, 16, 12     # L=12 matches the depthwise convs
    shape = (N, C, H, W, L)
    p = jax.random.normal(ks[0], shape, jnp.float32)
    u_plus = jax.random.normal(ks[1], shape, jnp.float32)
    u_minus = jax.random.normal(ks[2], shape, jnp.float32)
    v_plus = jax.random.normal(ks[3], shape, jnp.float32)
    v_minus = jax.random.normal(ks[4], shape, jnp.float32)
    inputs = jnp.stack([p, u_plus, u_minus, v_plus, v_minus], axis=0)

    out = pde_upwind(inputs)
    out = jax.block_until_ready(out)

    ref = _reference(p, u_plus, u_minus, v_plus, v_minus, 1.0 / 256, 1.0 / 256)
    assert out.shape == ref.shape and out.dtype == ref.dtype
    assert jnp.allclose(out, ref, atol=1e-4, rtol=1e-4), "mismatch vs reference"

    print("KERNEL_OK")
</pallas_src>

<mosaic_0001>
module attributes {stable_mosaic.version = 11 : i64} {
  func.func @_upwind_kernel(%arg0: i32, %arg1: memref<2x16x192xf32, #tpu.memory_space<vmem>>, %arg2: memref<2x16x192xf32, #tpu.memory_space<vmem>>, %arg3: memref<2x16x192xf32, #tpu.memory_space<vmem>>, %arg4: memref<2x16x192xf32, #tpu.memory_space<vmem>>, %arg5: memref<2x16x192xf32, #tpu.memory_space<vmem>>, %arg6: memref<2x16x192xf32, #tpu.memory_space<vmem>>) attributes {dimension_semantics = [#tpu.dimension_semantics<parallel>], iteration_bounds = array<i64: 2>, scalar_prefetch = 0 : i64, scratch_operands = 0 : i64, tpu.core_type = #tpu.core_type<tc>, window_params = [{transform_indices = @transform_0, window_bounds = array<i64: 2, 16, 192>}, {transform_indices = @transform_1, window_bounds = array<i64: 2, 16, 192>}, {transform_indices = @transform_2, window_bounds = array<i64: 2, 16, 192>}, {transform_indices = @transform_3, window_bounds = array<i64: 2, 16, 192>}, {transform_indices = @transform_4, window_bounds = array<i64: 2, 16, 192>}, {transform_indices = @transform_5, window_bounds = array<i64: 2, 16, 192>}]} {
    %c0 = arith.constant 0 : index
    %c0_0 = arith.constant 0 : index
    %c0_1 = arith.constant 0 : index
    %0 = vector.load %arg1[%c0, %c0_0, %c0_1] : memref<2x16x192xf32, #tpu.memory_space<vmem>>, vector<2x16x192xf32>
    %1 = tpu.iota {dimensions = array<i32: 1>} : vector<2x16x192xi32>
    %2 = tpu.iota {dimensions = array<i32: 2>} : vector<2x16x192xi32>
    %c15_i32 = arith.constant 15 : i32
    %3 = tpu.dynamic_rotate %0 by %c15_i32 dim 1 : vector<2x16x192xf32>, i32 -> vector<2x16x192xf32>
    %c1_i32 = arith.constant 1 : i32
    %4 = tpu.dynamic_rotate %0 by %c1_i32 dim 1 : vector<2x16x192xf32>, i32 -> vector<2x16x192xf32>
    %c15_i32_2 = arith.constant 15 : i32
    %5 = vector.broadcast %c15_i32_2 : i32 to vector<2x16x192xi32>
    %6 = arith.cmpi eq, %1, %5 : vector<2x16x192xi32>
    %7 = arith.subf %3, %0 : vector<2x16x192xf32>
    %cst = arith.constant 1.280000e+02 : f32
    %8 = vector.broadcast %cst : f32 to vector<2x16x192xf32>
    %9 = arith.mulf %7, %8 : vector<2x16x192xf32>
    %cst_3 = arith.constant 0.000000e+00 : f32
    %10 = vector.broadcast %cst_3 : f32 to vector<2x16x192xf32>
    %11 = arith.select %6, %10, %9 : vector<2x16x192xi1>, vector<2x16x192xf32>
    %c0_i32 = arith.constant 0 : i32
    %12 = vector.broadcast %c0_i32 : i32 to vector<2x16x192xi32>
    %13 = arith.cmpi eq, %1, %12 : vector<2x16x192xi32>
    %14 = arith.subf %0, %4 : vector<2x16x192xf32>
    %cst_4 = arith.constant 1.280000e+02 : f32
    %15 = vector.broadcast %cst_4 : f32 to vector<2x16x192xf32>
    %16 = arith.mulf %14, %15 : vector<2x16x192xf32>
    %cst_5 = arith.constant 0.000000e+00 : f32
    %17 = vector.broadcast %cst_5 : f32 to vector<2x16x192xf32>
    %18 = arith.select %13, %17, %16 : vector<2x16x192xi1>, vector<2x16x192xf32>
    %c180_i32 = arith.constant 180 : i32
    %19 = tpu.dynamic_rotate %0 by %c180_i32 dim 2 : vector<2x16x192xf32>, i32 -> vector<2x16x192xf32>
    %c12_i32 = arith.constant 12 : i32
    %20 = tpu.dynamic_rotate %0 by %c12_i32 dim 2 : vector<2x16x192xf32>, i32 -> vector<2x16x192xf32>
    %c180_i32_6 = arith.constant 180 : i32
    %21 = vector.broadcast %c180_i32_6 : i32 to vector<2x16x192xi32>
    %22 = arith.cmpi sge, %2, %21 : vector<2x16x192xi32>
    %23 = arith.subf %19, %0 : vector<2x16x192xf32>
    %cst_7 = arith.constant 1.280000e+02 : f32
    %24 = vector.broadcast %cst_7 : f32 to vector<2x16x192xf32>
    %25 = arith.mulf %23, %24 : vector<2x16x192xf32>
    %cst_8 = arith.constant 0.000000e+00 : f32
    %26 = vector.broadcast %cst_8 : f32 to vector<2x16x192xf32>
    %27 = arith.select %22, %26, %25 : vector<2x16x192xi1>, vector<2x16x192xf32>
    %c12_i32_9 = arith.constant 12 : i32
    %28 = vector.broadcast %c12_i32_9 : i32 to vector<2x16x192xi32>
    %29 = arith.cmpi slt, %2, %28 : vector<2x16x192xi32>
    %30 = arith.subf %0, %20 : vector<2x16x192xf32>
    %cst_10 = arith.constant 1.280000e+02 : f32
    %31 = vector.broadcast %cst_10 : f32 to vector<2x16x192xf32>
    %32 = arith.mulf %30, %31 : vector<2x16x192xf32>
    %cst_11 = arith.constant 0.000000e+00 : f32
    %33 = vector.broadcast %cst_11 : f32 to vector<2x16x192xf32>
    %34 = arith.select %29, %33, %32 : vector<2x16x192xi1>, vector<2x16x192xf32>
    %c0_12 = arith.constant 0 : index
    %c0_13 = arith.constant 0 : index
    %c0_14 = arith.constant 0 : index
    %35 = vector.load %arg3[%c0_12, %c0_13, %c0_14] : memref<2x16x192xf32, #tpu.memory_space<vmem>>, vector<2x16x192xf32>
    %36 = arith.mulf %11, %35 : vector<2x16x192xf32>
    %c0_15 = arith.constant 0 : index
    %c0_16 = arith.constant 0 : index
    %c0_17 = arith.constant 0 : index
    %37 = vector.load %arg2[%c0_15, %c0_16, %c0_17] : memref<2x16x192xf32, #tpu.memory_space<vmem>>, vector<2x16x192xf32>
    %38 = arith.mulf %18, %37 : vector<2x16x192xf32>
    %39 = arith.subf %36, %38 : vector<2x16x192xf32>
    %c0_18 = arith.constant 0 : index
    %c0_19 = arith.constant 0 : index
    %c0_20 = arith.constant 0 : index
    %40 = vector.load %arg5[%c0_18, %c0_19, %c0_20] : memref<2x16x192xf32, #tpu.memory_space<vmem>>, vector<2x16x192xf32>
    %41 = arith.mulf %27, %40 : vector<2x16x192xf32>
    %42 = arith.addf %39, %41 : vector<2x16x192xf32>
    %c0_21 = arith.constant 0 : index
    %c0_22 = arith.constant 0 : index
    %c0_23 = arith.constant 0 : index
    %43 = vector.load %arg4[%c0_21, %c0_22, %c0_23] : memref<2x16x192xf32, #tpu.memory_space<vmem>>, vector<2x16x192xf32>
    %44 = arith.mulf %34, %43 : vector<2x16x192xf32>
    %45 = arith.subf %42, %44 : vector<2x16x192xf32>
    %c0_24 = arith.constant 0 : index
    %c0_25 = arith.constant 0 : index
    %c0_26 = arith.constant 0 : index
    %46 = vector.load %arg6[%c0_24, %c0_25, %c0_26] : memref<2x16x192xf32, #tpu.memory_space<vmem>>, vector<2x16x192xf32>
    tpu.vector_store %arg6[%c0_24, %c0_25, %c0_26], %45 {strides = array<i32>} : memref<2x16x192xf32, #tpu.memory_space<vmem>>, vector<2x16x192xf32>,
    return
  }
  func.func @transform_0(%arg0: i32) -> (i32, i32, i32) {
    %c0_i32 = arith.constant 0 : i32
    %c0_i32_0 = arith.constant 0 : i32
    %c0_i32_1 = arith.constant 0 : i32
    return %arg0, %c0_i32, %c0_i32_0 : i32, i32, i32
  }
  func.func @transform_1(%arg0: i32) -> (i32, i32, i32) {
    %c0_i32 = arith.constant 0 : i32
    %c0_i32_0 = arith.constant 0 : i32
    %c0_i32_1 = arith.constant 0 : i32
    return %arg0, %c0_i32, %c0_i32_0 : i32, i32, i32
  }
  func.func @transform_2(%arg0: i32) -> (i32, i32, i32) {
    %c0_i32 = arith.constant 0 : i32
    %c0_i32_0 = arith.constant 0 : i32
    %c0_i32_1 = arith.constant 0 : i32
    return %arg0, %c0_i32, %c0_i32_0 : i32, i32, i32
  }
  func.func @transform_3(%arg0: i32) -> (i32, i32, i32) {
    %c0_i32 = arith.constant 0 : i32
    %c0_i32_0 = arith.constant 0 : i32
    %c0_i32_1 = arith.constant 0 : i32
    return %arg0, %c0_i32, %c0_i32_0 : i32, i32, i32
  }
  func.func @transform_4(%arg0: i32) -> (i32, i32, i32) {
    %c0_i32 = arith.constant 0 : i32
    %c0_i32_0 = arith.constant 0 : i32
    %c0_i32_1 = arith.constant 0 : i32
    return %arg0, %c0_i32, %c0_i32_0 : i32, i32, i32
  }
  func.func @transform_5(%arg0: i32) -> (i32, i32, i32) {
    %c0_i32 = arith.constant 0 : i32
    %c0_i32_0 = arith.constant 0 : i32
    %c0_i32_1 = arith.constant 0 : i32
    return %arg0, %c0_i32, %c0_i32_0 : i32, i32, i32
  }
}

</mosaic_0001>

<llo_original>
// kernel: tpu_custom_call.1
$region0: #{tpu_custom_call.1}
  #allocation0 [shape = 'u32[]', space=smem, size = 0x4, offset = 0x4, fixed_abs, tag = 'smem constant byte address 0x4 - core index']
  #allocation1 [shape = 'u32[144,128]{1,0:T(1,128)}', space=vmem, size = 0x12000, scoped, tag = 'internal scratch']
  %s0 = inlined_call_operand.hbm [shape: f32[4,16,192], index: 0, kind: input, shape index: {}]
  %s1 = inlined_call_operand.hbm [shape: f32[4,16,192], index: 1, kind: input, shape index: {}]
  %s2 = inlined_call_operand.hbm [shape: f32[4,16,192], index: 2, kind: input, shape index: {}]
  %s3 = inlined_call_operand.hbm [shape: f32[4,16,192], index: 3, kind: input, shape index: {}]
  %s4 = inlined_call_operand.hbm [shape: f32[4,16,192], index: 4, kind: input, shape index: {}]
  %s5 = inlined_call_operand.hbm [shape: f32[4,16,192], index: 5, kind: output, shape index: {}]
  %s6 = sld [smem:[#allocation0]]
  $region73: #{tpu_custom_call.1} parent=0
    _
  %s8 = ssub.s32 1, %s6
  %s9 = scalar_select 0, %s8, %s6
  $region1: #{tpu_custom_call.1} parent=0
    #allocation2 [shape = 'u8[65536]{0}', space=vmem, size = 0x10000, scoped, tag = 'input window, operand 0']
    #allocation3 [shape = 's32[2]{0}', space=sflag, size = 0x8, scoped, tag = 'scoped memory for tpu_custom_call.1']
    #allocation4 [shape = 's32[2]{0}', space=sflag, size = 0x8, scoped, tag = 'scoped memory for tpu_custom_call.1']
    #allocation5 [shape = 'u8[65536]{0}', space=vmem, size = 0x10000, scoped, tag = 'input window, operand 1']
    #allocation6 [shape = 's32[2]{0}', space=sflag, size = 0x8, scoped, tag = 'scoped memory for tpu_custom_call.1']
    #allocation7 [shape = 'u8[65536]{0}', space=vmem, size = 0x10000, scoped, tag = 'input window, operand 2']
    #allocation8 [shape = 'u8[65536]{0}', space=vmem, size = 0x10000, scoped, tag = 'input window, operand 3']
    #allocation9 [shape = 's32[2]{0}', space=sflag, size = 0x8, scoped, tag = 'scoped memory for tpu_custom_call.1']
    #allocation10 [shape = 'u8[65536]{0}', space=vmem, size = 0x10000, scoped, tag = 'input window, operand 4']
    #allocation11 [shape = 'u8[65536]{0}', space=vmem, size = 0x10000, scoped, tag = 'output window, operand 0']
    %10 = vsyncpa [#allocation3], 0
    %s11 = scalar_lea.sflag [#allocation3], 1
    %12 = vsyncpa %s11, 0
    %13 = vsyncpa [#allocation6], 0
    %s14 = scalar_lea.sflag [#allocation6], 1
    %15 = vsyncpa %s14, 0
    %16 = vsyncpa [#allocation9], 0
    %s17 = scalar_lea.sflag [#allocation9], 1
    %18 = vsyncpa %s17, 0
    %19 = vsyncpa [#allocation4], 0
    %s20 = scalar_lea.sflag [#allocation4], 1
    %21 = vsyncpa %s20, 0
    loop: start=0, step=1, limit=4
    $region2: #{tpu_custom_call.1} parent=1 // loop_pre_header
      _
    $region3: #{tpu_custom_call.1} parent=1 // loop_header
      %s23 = sphi 0, %s27
      %p24 = scmp.ge.s32.totalorder %s23, 4
      %s33 = sphi 0, %s35
      %s36 = sphi 0, %s33
      %s37 = sphi 0, %s36
      %s53 = sphi 0, %s37
      %s59 = sphi 0, %s61
      %s62 = sphi 0, %s59
      %s63 = sphi 0, %s62
      %s79 = sphi 0, %s63
      %s85 = sphi 0, %s87
      %s88 = sphi 0, %s85
      %s89 = sphi 0, %s88
      %s105 = sphi 0, %s89
      %s111 = sphi 0, %s113
      %s114 = sphi 0, %s111
      %s115 = sphi 0, %s114
      %s131 = sphi 0, %s115
      %s137 = sphi 0, %s139
      %s140 = sphi 0, %s137
      %s141 = sphi 0, %s140
      %s157 = sphi 0, %s141
      %s163 = sphi 0, %s165
      %s166 = sphi 0, %s163
      %s167 = sphi 0, %s166
      %s183 = sphi 0, %s167
    $region4: #{tpu_custom_call.1} parent=1 // loop_header_branch
      %26 = sbr.rel (%p24) target = $region8
    $region5: #{tpu_custom_call.1} parent=1 // loop_body
      %s28 = ssub.s32 %s23, 1
      %s29 = ssub.s32 %s23, 2
      %s30 = sadd.s32 %s23, 1
      %s31 = ssub.s32 %s23, %s30
      %p32 = scmp.eq.s32.totalorder %s31, 0
      %s34 = sadd.s32 %s33, 1
      %s35 = scalar_select %p32, %s33, %s34
      %p38 = pneg %p32
      %p39 = scmp.eq.s32.totalorder %s23, 1
      %p40 = por %p38, %p39
      %p41 = scmp.ne.s32.totalorder %s33, %s36
      %p42 = scmp.eq.s32.totalorder %s23, 0
      %p43 = por %p41, %p42
      %p44 = scmp.ne.s32.totalorder %s33, %s36
      %p45 = scmp.eq.s32.totalorder %s28, 1
      %p46 = por %p44, %p45
      %p47 = scmp.ne.s32.totalorder %s36, %s37
      %p48 = scmp.eq.s32.totalorder %s28, 0
      %p49 = por %p47, %p48
      %p50 = scmp.ne.s32.totalorder %s36, %s37
      %p51 = scmp.eq.s32.totalorder %s29, 1
      %p52 = por %p50, %p51
      %p54 = scmp.ne.s32.totalorder %s37, %s53
      %p55 = scmp.eq.s32.totalorder %s29, 0
      %p56 = por %p54, %p55
      %s57 = ssub.s32 %s23, %s30
      %p58 = scmp.eq.s32.totalorder %s57, 0
      %s60 = sadd.s32 %s59, 1
      %s61 = scalar_select %p58, %s59, %s60
      %p64 = pneg %p58
      %p65 = scmp.eq.s32.totalorder %s23, 1
      %p66 = por %p64, %p65
      %p67 = scmp.ne.s32.totalorder %s59, %s62
      %p68 = scmp.eq.s32.totalorder %s23, 0
      %p69 = por %p67, %p68
      %p70 = scmp.ne.s32.totalorder %s59, %s62
      %p71 = scmp.eq.s32.totalorder %s28, 1
      %p72 = por %p70, %p71
      %p73 = scmp.ne.s32.totalorder %s62, %s63
      %p74 = scmp.eq.s32.totalorder %s28, 0
      %p75 = por %p73, %p74
      %p76 = scmp.ne.s32.totalorder %s62, %s63
      %p77 = scmp.eq.s32.totalorder %s29, 1
      %p78 = por %p76, %p77
      %p80 = scmp.ne.s32.totalorder %s63, %s79
      %p81 = scmp.eq.s32.totalorder %s29, 0
      %p82 = por %p80, %p81
      %s83 = ssub.s32 %s23, %s30
      %p84 = scmp.eq.s32.totalorder %s83, 0
      %s86 = sadd.s32 %s85, 1
      %s87 = scalar_select %p84, %s85, %s86
      %p90 = pneg %p84
      %p91 = scmp.eq.s32.totalorder %s23, 1
      %p92 = por %p90, %p91
      %p93 = scmp.ne.s32.totalorder %s85, %s88
      %p94 = scmp.eq.s32.totalorder %s23, 0
      %p95 = por %p93, %p94
      %p96 = scmp.ne.s32.totalorder %s85, %s88
      %p97 = scmp.eq.s32.totalorder %s28, 1
      %p98 = por %p96, %p97
      %p99 = scmp.ne.s32.totalorder %s88, %s89
      %p100 = scmp.eq.s32.totalorder %s28, 0
      %p101 = por %p99, %p100
      %p102 = scmp.ne.s32.totalorder %s88, %s89
      %p103 = scmp.eq.s32.totalorder %s29, 1
      %p104 = por %p102, %p103
      %p106 = scmp.ne.s32.totalorder %s89, %s105
      %p107 = scmp.eq.s32.totalorder %s29, 0
      %p108 = por %p106, %p107
      %s109 = ssub.s32 %s23, %s30
      %p110 = scmp.eq.s32.totalorder %s109, 0
      %s112 = sadd.s32 %s111, 1
      %s113 = scalar_select %p110, %s111, %s112
      %p116 = pneg %p110
      %p117 = scmp.eq.s32.totalorder %s23, 1
      %p118 = por %p116, %p117
      %p119 = scmp.ne.s32.totalorder %s111, %s114
      %p120 = scmp.eq.s32.totalorder %s23, 0
      %p121 = por %p119, %p120
      %p122 = scmp.ne.s32.totalorder %s111, %s114
      %p123 = scmp.eq.s32.totalorder %s28, 1
      %p124 = por %p122, %p123
      %p125 = scmp.ne.s32.totalorder %s114, %s115
      %p126 = scmp.eq.s32.totalorder %s28, 0
      %p127 = por %p125, %p126
      %p128 = scmp.ne.s32.totalorder %s114, %s115
      %p129 = scmp.eq.s32.totalorder %s29, 1
      %p130 = por %p128, %p129
      %p132 = scmp.ne.s32.totalorder %s115, %s131
      %p133 = scmp.eq.s32.totalorder %s29, 0
      %p134 = por %p132, %p133
      %s135 = ssub.s32 %s23, %s30
      %p136 = scmp.eq.s32.totalorder %s135, 0
      %s138 = sadd.s32 %s137, 1
      %s139 = scalar_select %p136, %s137, %s138
      %p142 = pneg %p136
      %p143 = scmp.eq.s32.totalorder %s23, 1
      %p144 = por %p142, %p143
      %p145 = scmp.ne.s32.totalorder %s137, %s140
      %p146 = scmp.eq.s32.totalorder %s23, 0
      %p147 = por %p145, %p146
      %p148 = scmp.ne.s32.totalorder %s137, %s140
      %p149 = scmp.eq.s32.totalorder %s28, 1
      %p150 = por %p148, %p149
      %p151 = scmp.ne.s32.totalorder %s140, %s141
      %p152 = scmp.eq.s32.totalorder %s28, 0
      %p153 = por %p151, %p152
      %p154 = scmp.ne.s32.totalorder %s140, %s141
      %p155 = scmp.eq.s32.totalorder %s29, 1
      %p156 = por %p154, %p155
      %p158 = scmp.ne.s32.totalorder %s141, %s157
      %p159 = scmp.eq.s32.totalorder %s29, 0
      %p160 = por %p158, %p159
      %s161 = ssub.s32 %s23, %s30
      %p162 = scmp.eq.s32.totalorder %s161, 0
      %s164 = sadd.s32 %s163, 1
      %s165 = scalar_select %p162, %s163, %s164
      %p168 = pneg %p162
      %p169 = scmp.eq.s32.totalorder %s23, 1
      %p170 = por %p168, %p169
      %p171 = scmp.ne.s32.totalorder %s163, %s166
      %p172 = scmp.eq.s32.totalorder %s23, 0
      %p173 = por %p171, %p172
      %p174 = scmp.ne.s32.totalorder %s163, %s166
      %p175 = scmp.eq.s32.totalorder %s28, 1
      %p176 = por %p174, %p175
      %p177 = scmp.ne.s32.totalorder %s166, %s167
      %p178 = scmp.eq.s32.totalorder %s28, 0
      %p179 = por %p177, %p178
      %p180 = scmp.ne.s32.totalorder %s166, %s167
      %p181 = scmp.eq.s32.totalorder %s29, 1
      %p182 = por %p180, %p181
      %p184 = scmp.ne.s32.totalorder %s167, %s183
      %p185 = scmp.eq.s32.totalorder %s29, 0
      %p186 = por %p184, %p185
      %p187 = scmp.le.s32.totalorder 1, %s23
      %p188 = scmp.lt.s32.totalorder %s23, 3
      %p189 = pnand %p187, %p188
      %p190 = pneg %p189
      // Predicated region
      $region9: #{tpu_custom_call.1} parent=5 // pred_check
        _
      $region10: #{tpu_custom_call.1} parent=5 // pred_check_branch
        %192 = sbr.rel (%p189) target = $region12
      $region11: #{tpu_custom_call.1} parent=5 // pred_region
        %s193 = ssub.s32 %s23, 1
      $region12: #{tpu_custom_call.1} parent=5 // pred_fallthru
        _
      %p194 = scmp.lt.s32.totalorder %s23, 2
      // Predicated region
      $region13: #{tpu_custom_call.1} parent=5 // pred_check
        %p195 = pneg %p194
      $region14: #{tpu_custom_call.1} parent=5 // pred_check_branch
        %197 = sbr.rel (%p195) target = $region16
      $region15: #{tpu_custom_call.1} parent=5 // pred_region
        // Predicated region
        $region17: #{tpu_custom_call.1} parent=15 // pred_check
          %p198 = pneg %p43
        $region18: #{tpu_custom_call.1} parent=15 // pred_check_branch
          %200 = sbr.rel (%p198) target = $region20
        $region19: #{tpu_custom_call.1} parent=15 // pred_region
          %s201 = sand.u32 %s33, 1
          %s202 = scalar_lea.sflag [#allocation3], %s201
          %s203 = sand.u32 %s33, 1
          %s204 = smul.addr %s203, 64
          %s205 = scalar_lea.vmem [#allocation2], %s204
          %s206 = smul.u32 2, %s23
          %s208 = ssub.s32 1024, 1024
          %209 = vsyncadd %s202, %s208
          %s210 = smul.addr %s206, 4
          %s211 = smul.addr %s210, 128
          %s212 = scalar_lea.hbm %s0, %s211
          %s213 = sshll.u32 %s205, 4
          %s214 = int_to_ptr.vmem [resolvable:$true] %s213
          %219 = dma.hbm_to_vmem [thread:$0]  %s212, 1024, %s214, %s202, 256, 256, 16
        $region20: #{tpu_custom_call.1} parent=15 // pred_fallthru
          _
        // Predicated region
        $region21: #{tpu_custom_call.1} parent=15 // pred_check
          %p220 = pneg %p69
        $region22: #{tpu_custom_call.1} parent=15 // pred_check_branch
          %222 = sbr.rel (%p220) target = $region24
        $region23: #{tpu_custom_call.1} parent=15 // pred_region
          %s223 = sand.u32 %s23, 1
          %s224 = scalar_lea.sflag [#allocation6], %s223
          %s225 = sand.u32 %s59, 1
          %s226 = smul.addr %s225, 64
          %s227 = scalar_lea.vmem [#allocation5], %s226
          %s228 = smul.u32 2, %s23
          %s230 = ssub.s32 1024, 1024
          %231 = vsyncadd %s224, %s230
          %s232 = smul.addr %s228, 4
          %s233 = smul.addr %s232, 128
          %s234 = scalar_lea.hbm %s1, %s233
          %s235 = sshll.u32 %s227, 4
          %s236 = int_to_ptr.vmem [resolvable:$true] %s235
          %241 = dma.hbm_to_vmem [thread:$0]  %s234, 1024, %s236, %s224, 256, 256, 16
        $region24: #{tpu_custom_call.1} parent=15 // pred_fallthru
          _
        // Predicated region
        $region25: #{tpu_custom_call.1} parent=15 // pred_check
          %p242 = pneg %p95
        $region26: #{tpu_custom_call.1} parent=15 // pred_check_branch
          %244 = sbr.rel (%p242) target = $region28
        $region27: #{tpu_custom_call.1} parent=15 // pred_region
          %s245 = sand.u32 %s23, 1
          %s246 = scalar_lea.sflag [#allocation6], %s245
          %s247 = sand.u32 %s85, 1
          %s248 = smul.addr %s247, 64
          %s249 = scalar_lea.vmem [#allocation7], %s248
          %s250 = smul.u32 2, %s23
          %s252 = ssub.s32 1024, 1024
          %253 = vsyncadd %s246, %s252
          %s254 = smul.addr %s250, 4
          %s255 = smul.addr %s254, 128
          %s256 = scalar_lea.hbm %s2, %s255
          %s257 = sshll.u32 %s249, 4
          %s258 = int_to_ptr.vmem [resolvable:$true] %s257
          %263 = dma.hbm_to_vmem [thread:$0]  %s256, 1024, %s258, %s246, 256, 256, 16
        $region28: #{tpu_custom_call.1} parent=15 // pred_fallthru
          _
        // Predicated region
        $region29: #{tpu_custom_call.1} parent=15 // pred_check
          %p264 = pneg %p121
        $region30: #{tpu_custom_call.1} parent=15 // pred_check_branch
          %266 = sbr.rel (%p264) target = $region32
        $region31: #{tpu_custom_call.1} parent=15 // pred_region
          %s267 = sand.u32 %s23, 1
          %s268 = scalar_lea.sflag [#allocation9], %s267
          %s269 = sand.u32 %s111, 1
          %s270 = smul.addr %s269, 64
          %s271 = scalar_lea.vmem [#allocation8], %s270
          %s272 = smul.u32 2, %s23
          %s274 = ssub.s32 1024, 1024
          %275 = vsyncadd %s268, %s274
          %s276 = smul.addr %s272, 4
          %s277 = smul.addr %s276, 128
          %s278 = scalar_lea.hbm %s3, %s277
          %s279 = sshll.u32 %s271, 4
          %s280 = int_to_ptr.vmem [resolvable:$true] %s279
          %285 = dma.hbm_to_vmem [thread:$0]  %s278, 1024, %s280, %s268, 256, 256, 16
        $region32: #{tpu_custom_call.1} parent=15 // pred_fallthru
          _
        // Predicated region
        $region33: #{tpu_custom_call.1} parent=15 // pred_check
          %p286 = pneg %p147
        $region34: #{tpu_custom_call.1} parent=15 // pred_check_branch
          %288 = sbr.rel (%p286) target = $region36
        $region35: #{tpu_custom_call.1} parent=15 // pred_region
          %s289 = sand.u32 %s23, 1
          %s290 = scalar_lea.sflag [#allocation9], %s289
          %s291 = sand.u32 %s137, 1
          %s292 = smul.addr %s291, 64
          %s293 = scalar_lea.vmem [#allocation10], %s292
          %s294 = smul.u32 2, %s23
          %s296 = ssub.s32 1024, 1024
          %297 = vsyncadd %s290, %s296
          %s298 = smul.addr %s294, 4
          %s299 = smul.addr %s298, 128
          %s300 = scalar_lea.hbm %s4, %s299
          %s301 = sshll.u32 %s293, 4
          %s302 = int_to_ptr.vmem [resolvable:$true] %s301
          %307 = dma.hbm_to_vmem [thread:$0]  %s300, 1024, %s302, %s290, 256, 256, 16
        $region36: #{tpu_custom_call.1} parent=15 // pred_fallthru
          _
      $region16: #{tpu_custom_call.1} parent=5 // pred_fallthru
        _
      %p308 = scmp.le.s32.totalorder 1, %s23
      %p309 = scmp.lt.s32.totalorder %s23, 3
      %p310 = pnand %p308, %p309
      %p311 = pneg %p310
      // Predicated region
      $region37: #{tpu_custom_call.1} parent=5 // pred_check
        _
      $region38: #{tpu_custom_call.1} parent=5 // pred_check_branch
        %313 = sbr.rel (%p310) target = $region40
      $region39: #{tpu_custom_call.1} parent=5 // pred_region
        %s314 = ssub.s32 %s23, 1
        %s315 = sand.u32 %s36, 1
        %s316 = scalar_lea.sflag [#allocation3], %s315
        %s317 = sand.u32 %s36, 1
        %s318 = smul.addr %s317, 64
        %s319 = scalar_lea.vmem [#allocation2], %s318
        // Predicated region
        $region41: #{tpu_custom_call.1} parent=39 // pred_check
          %p320 = pneg %p49
        $region42: #{tpu_custom_call.1} parent=39 // pred_check_branch
          %322 = sbr.rel (%p320) target = $region44
        $region43: #{tpu_custom_call.1} parent=39 // pred_region
          %323 = dma.done %s316, 1024
        $region44: #{tpu_custom_call.1} parent=39 // pred_fallthru
          _
        %s324 = sand.u32 %s28, 1
        %s325 = scalar_lea.sflag [#allocation6], %s324
        %s326 = sand.u32 %s62, 1
        %s327 = smul.addr %s326, 64
        %s328 = scalar_lea.vmem [#allocation5], %s327
        // Predicated region
        $region45: #{tpu_custom_call.1} parent=39 // pred_check
          %p329 = pneg %p75
        $region46: #{tpu_custom_call.1} parent=39 // pred_check_branch
          %331 = sbr.rel (%p329) target = $region48
        $region47: #{tpu_custom_call.1} parent=39 // pred_region
          %332 = dma.done %s325, 1024
        $region48: #{tpu_custom_call.1} parent=39 // pred_fallthru
          _
        %s333 = sand.u32 %s28, 1
        %s334 = scalar_lea.sflag [#allocation6], %s333
        %s335 = sand.u32 %s88, 1
        %s336 = smul.addr %s335, 64
        %s337 = scalar_lea.vmem [#allocation7], %s336
        // Predicated region
        $region49: #{tpu_custom_call.1} parent=39 // pred_check
          %p338 = pneg %p101
        $region50: #{tpu_custom_call.1} parent=39 // pred_check_branch
          %340 = sbr.rel (%p338) target = $region52
        $region51: #{tpu_custom_call.1} parent=39 // pred_region
          %341 = dma.done %s334, 1024
        $region52: #{tpu_custom_call.1} parent=39 // pred_fallthru
          _
        %s342 = sand.u32 %s28, 1
        %s343 = scalar_lea.sflag [#allocation9], %s342
        %s344 = sand.u32 %s114, 1
        %s345 = smul.addr %s344, 64
        %s346 = scalar_lea.vmem [#allocation8], %s345
        // Predicated region
        $region53: #{tpu_custom_call.1} parent=39 // pred_check
          %p347 = pneg %p127
        $region54: #{tpu_custom_call.1} parent=39 // pred_check_branch
          %349 = sbr.rel (%p347) target = $region56
        $region55: #{tpu_custom_call.1} parent=39 // pred_region
          %350 = dma.done %s343, 1024
        $region56: #{tpu_custom_call.1} parent=39 // pred_fallthru
          _
        %s351 = sand.u32 %s28, 1
        %s352 = scalar_lea.sflag [#allocation9], %s351
        %s353 = sand.u32 %s140, 1
        %s354 = smul.addr %s353, 64
        %s355 = scalar_lea.vmem [#allocation10], %s354
        // Predicated region
        $region57: #{tpu_custom_call.1} parent=39 // pred_check
          %p356 = pneg %p153
        $region58: #{tpu_custom_call.1} parent=39 // pred_check_branch
          %358 = sbr.rel (%p356) target = $region60
        $region59: #{tpu_custom_call.1} parent=39 // pred_region
          %359 = dma.done %s352, 1024
        $region60: #{tpu_custom_call.1} parent=39 // pred_fallthru
          _
        %s360 = sand.u32 %s36, 1
        %s361 = scalar_lea.sflag [#allocation3], %s360
        %s362 = sand.u32 %s36, 1
        %s363 = smul.addr %s362, 64
        %s364 = scalar_lea.vmem [#allocation2], %s363
        %p365 = pneg %p49
        %p366 = pneg %p46
        %s367 = sand.u32 %s28, 1
        %s368 = scalar_lea.sflag [#allocation6], %s367
        %s369 = sand.u32 %s62, 1
        %s370 = smul.addr %s369, 64
        %s371 = scalar_lea.vmem [#allocation5], %s370
        %p372 = pneg %p75
        %p373 = pneg %p72
        %s374 = sand.u32 %s28, 1
        %s375 = scalar_lea.sflag [#allocation6], %s374
        %s376 = sand.u32 %s88, 1
        %s377 = smul.addr %s376, 64
        %s378 = scalar_lea.vmem [#allocation7], %s377
        %p379 = pneg %p101
        %p380 = pneg %p98
        %s381 = sand.u32 %s28, 1
        %s382 = scalar_lea.sflag [#allocation9], %s381
        %s383 = sand.u32 %s114, 1
        %s384 = smul.addr %s383, 64
        %s385 = scalar_lea.vmem [#allocation8], %s384
        %p386 = pneg %p127
        %p387 = pneg %p124
        %s388 = sand.u32 %s28, 1
        %s389 = scalar_lea.sflag [#allocation9], %s388
        %s390 = sand.u32 %s140, 1
        %s391 = smul.addr %s390, 64
        %s392 = scalar_lea.vmem [#allocation10], %s391
        %p393 = pneg %p153
        %p394 = pneg %p150
        %p395 = pneg %p179
        %p396 = pneg %p176
        %s397 = sand.u32 %s166, 1
        %s398 = scalar_lea.sflag [#allocation4], %s397
        %s399 = sand.u32 %s166, 1
        %s400 = smul.addr %s399, 64
        %s401 = scalar_lea.vmem [#allocation11], %s400
        %s402 = smul.u32 2, %s28
        %s403 = smul.u32 2, %s28
        %s404 = smul.u32 2, %s28
        %s405 = smul.u32 2, %s28
        %s406 = smul.u32 2, %s28
        %s407 = smul.u32 2, %s28
        %v408 = vld [vmem:[%s319] sm:$0xff]
        %v409 = vld [vmem:[%s319 + $0x8] sm:$0xff]
        %v410 = vld [vmem:[%s319 + $0x10] sm:$0xff]
        %v411 = vld [vmem:[%s319 + $0x18] sm:$0xff]
        %v412 = vld [vmem:[%s319 + $0x20] sm:$0xff]
        %v413 = vld [vmem:[%s319 + $0x28] sm:$0xff]
        %v414 = vld [vmem:[%s319 + $0x30] sm:$0xff]
        %v415 = vld [vmem:[%s319 + $0x38] sm:$0xff]
        %v416 = vlaneseq
        %v417 = vshrl.u32 %v416, 7
        %v418 = vadd.s32 %v417, 8
        %v419 = vlaneseq
        %v420 = vand.u32 %v419, 127
        %v421 = vadd.s32 %v420, 128
        %v422 = vrot.slane %v408, 1
        %v423 = vrot.slane %v409, 1
        %v424 = vrot.slane %v412, 1
        %v425 = vrot.slane %v413, 1
        %v426 = vrot.slane %v410, 1
        %v427 = vrot.slane %v411, 1
        %v428 = vrot.slane %v414, 1
        %v429 = vrot.slane %v415, 1
        %vm430 = vcmp.lt.s32.totalorder %v417, 7
        %v431 = vsel %vm430, %v422, %v426
        %v432 = vsel %vm430, %v423, %v427
        %v433 = vsel %vm430, %v424, %v428
        %v434 = vsel %vm430, %v425, %v429
        %v435 = vsel %vm430, %v426, %v422
        %v436 = vsel %vm430, %v427, %v423
        %v437 = vsel %vm430, %v428, %v424
        %v438 = vsel %vm430, %v429, %v425
        %v439 = vrot.slane %v408, 7
        %v440 = vrot.slane %v409, 7
        %v441 = vrot.slane %v412, 7
        %v442 = vrot.slane %v413, 7
        %v443 = vrot.slane %v410, 7
        %v444 = vrot.slane %v411, 7
        %v445 = vrot.slane %v414, 7
        %v446 = vrot.slane %v415, 7
        %vm447 = vcmp.lt.s32.totalorder %v417, 1
        %v448 = vsel %vm447, %v439, %v443
        %v449 = vsel %vm447, %v440, %v444
        %v450 = vsel %vm447, %v441, %v445
        %v451 = vsel %vm447, %v442, %v446
        %v452 = vsel %vm447, %v443, %v439
        %v453 = vsel %vm447, %v444, %v440
        %v454 = vsel %vm447, %v445, %v441
        %v455 = vsel %vm447, %v446, %v442
        %vm456 = vcmp.eq.s32.totalorder %v417, 15
        %vm457 = vcmp.eq.s32.totalorder %v418, 15
        %v458 = vsub.f32 %v431, %v408
        %v459 = vsub.f32 %v432, %v409
        %v460 = vsub.f32 %v435, %v410
        %v461 = vsub.f32 %v436, %v411
        %v462 = vsub.f32 %v433, %v412
        %v463 = vsub.f32 %v434, %v413
        %v464 = vsub.f32 %v437, %v414
        %v465 = vsub.f32 %v438, %v415
        %v466 = vmul.f32 %v458, 128.0
        %v467 = vmul.f32 %v459, 128.0
        %v468 = vmul.f32 %v460, 128.0
        %v469 = vmul.f32 %v461, 128.0
        %v470 = vmul.f32 %v462, 128.0
        %v471 = vmul.f32 %v463, 128.0
        %v472 = vmul.f32 %v464, 128.0
        %v473 = vmul.f32 %v465, 128.0
        %v474 = vsel %vm456, 0.0, %v466
        %v475 = vsel %vm456, 0.0, %v467
        %v476 = vsel %vm457, 0.0, %v468
        %v477 = vsel %vm457, 0.0, %v469
        %v478 = vsel %vm456, 0.0, %v470
        %v479 = vsel %vm456, 0.0, %v471
        %v480 = vsel %vm457, 0.0, %v472
        %v481 = vsel %vm457, 0.0, %v473
        %vm482 = vcmp.eq.s32.totalorder %v417, 0
        %vm483 = vcmp.eq.s32.totalorder %v418, 0
        %v484 = vsub.f32 %v408, %v452
        %v485 = vsub.f32 %v409, %v453
        %v486 = vsub.f32 %v410, %v448
        %v487 = vsub.f32 %v411, %v449
        %v488 = vsub.f32 %v412, %v454
        %v489 = vsub.f32 %v413, %v455
        %v490 = vsub.f32 %v414, %v450
        %v491 = vsub.f32 %v415, %v451
        %v492 = vmul.f32 %v484, 128.0
        %v493 = vmul.f32 %v485, 128.0
        %v494 = vmul.f32 %v486, 128.0
        %v495 = vmul.f32 %v487, 128.0
        %v496 = vmul.f32 %v488, 128.0
        %v497 = vmul.f32 %v489, 128.0
        %v498 = vmul.f32 %v490, 128.0
        %v499 = vmul.f32 %v491, 128.0
        %v500 = vsel %vm482, 0.0, %v492
        %v501 = vsel %vm482, 0.0, %v493
        %v502 = vsel %vm483, 0.0, %v494
        %v503 = vsel %vm483, 0.0, %v495
        %v504 = vsel %vm482, 0.0, %v496
        %v505 = vsel %vm482, 0.0, %v497
        %v506 = vsel %vm483, 0.0, %v498
        %v507 = vsel %vm483, 0.0, %v499
        %vm508 = vcmask 1048064
        %509 = vrot.lane.b32.xlu0 %v408, 64
        %v510 = vpop.permute.xlu0 %509
        %511 = vrot.lane.b32.xlu0 %v410, 64
        %v512 = vpop.permute.xlu0 %511
        %513 = vrot.lane.b32.xlu0 %v412, 64
        %v514 = vpop.permute.xlu0 %513
        %515 = vrot.lane.b32.xlu0 %v414, 64
        %v516 = vpop.permute.xlu0 %515
        %v517 = vsel %vm508, %v510, %v409
        %v518 = vsel %vm508, %v512, %v411
        %v519 = vsel %vm508, %v514, %v413
        %v520 = vsel %vm508, %v516, %v415
        %521 = vrot.lane.b32.xlu0 %v517, 64
        %v522 = vpop.permute.xlu0 %521
        %523 = vrot.lane.b32.xlu0 %v518, 64
        %v524 = vpop.permute.xlu0 %523
        %525 = vrot.lane.b32.xlu0 %v519, 64
        %v526 = vpop.permute.xlu0 %525
        %527 = vrot.lane.b32.xlu0 %v520, 64
        %v528 = vpop.permute.xlu0 %527
        %v529 = vsel %vm508, %v522, %v510
        %v530 = vsel %vm508, %v524, %v512
        %v531 = vsel %vm508, %v526, %v514
        %v532 = vsel %vm508, %v528, %v516
        %vm533 = vcmp.ge.s32.totalorder %v420, 180
        %vm534 = vcmp.ge.s32.totalorder %v421, 180
        %543 = vrot.lane.b32.xlu0 %v408, 12
        %v544 = vpop.permute.xlu0 %543
        %545 = vrot.lane.b32.xlu0 %v409, 12
        %v546 = vpop.permute.xlu0 %545
        %547 = vrot.lane.b32.xlu0 %v410, 12
        %v548 = vpop.permute.xlu0 %547
        %549 = vrot.lane.b32.xlu0 %v411, 12
        %v550 = vpop.permute.xlu0 %549
        %551 = vrot.lane.b32.xlu0 %v412, 12
        %v552 = vpop.permute.xlu0 %551
        %553 = vrot.lane.b32.xlu0 %v413, 12
        %v554 = vpop.permute.xlu0 %553
        %555 = vrot.lane.b32.xlu0 %v414, 12
        %v556 = vpop.permute.xlu0 %555
        %557 = vrot.lane.b32.xlu0 %v415, 12
        %v558 = vpop.permute.xlu0 %557
        %vm559 = vcmask 97280
        %v560 = vsel %vm559, %v544, %v546
        %v561 = vsel %vm559, %v548, %v550
        %v562 = vsel %vm559, %v552, %v554
        %v563 = vsel %vm559, %v556, %v558
        %v572 = vsub.f32 %v408, %v544
        %v573 = vsub.f32 %v517, %v560
        %v574 = vsub.f32 %v410, %v548
        %v575 = vsub.f32 %v518, %v561
        %v576 = vsub.f32 %v412, %v552
        %v577 = vsub.f32 %v519, %v562
        %v578 = vsub.f32 %v414, %v556
        %v579 = vsub.f32 %v520, %v563
        %v580 = vmul.f32 %v572, 128.0
        %v581 = vmul.f32 %v573, 128.0
        %v582 = vmul.f32 %v574, 128.0
        %v583 = vmul.f32 %v575, 128.0
        %v584 = vmul.f32 %v576, 128.0
        %v585 = vmul.f32 %v577, 128.0
        %v586 = vmul.f32 %v578, 128.0
        %v587 = vmul.f32 %v579, 128.0
        %596 = vrot.lane.b32.xlu0 %v580, 116
        %v597 = vpop.permute.xlu0 %596
        %598 = vrot.lane.b32.xlu0 %v581, 116
        %v599 = vpop.permute.xlu0 %598
        %600 = vrot.lane.b32.xlu0 %v582, 116
        %v601 = vpop.permute.xlu0 %600
        %602 = vrot.lane.b32.xlu0 %v583, 116
        %v603 = vpop.permute.xlu0 %602
        %604 = vrot.lane.b32.xlu0 %v584, 116
        %v605 = vpop.permute.xlu0 %604
        %606 = vrot.lane.b32.xlu0 %v585, 116
        %v607 = vpop.permute.xlu0 %606
        %608 = vrot.lane.b32.xlu0 %v586, 116
        %v609 = vpop.permute.xlu0 %608
        %610 = vrot.lane.b32.xlu0 %v587, 116
        %v611 = vpop.permute.xlu0 %610
        %vm612 = vcmask 949248
        %v613 = vsel %vm612, %v597, %v599
        %v614 = vsel %vm612, %v601, %v603
        %v615 = vsel %vm612, %v605, %v607
        %v616 = vsel %vm612, %v609, %v611
        %v625 = vsel %vm533, 0.0, %v613
        %v626 = vsel %vm534, 0.0, %v599
        %v627 = vsel %vm533, 0.0, %v614
        %v628 = vsel %vm534, 0.0, %v603
        %v629 = vsel %vm533, 0.0, %v615
        %v630 = vsel %vm534, 0.0, %v607
        %v631 = vsel %vm533, 0.0, %v616
        %v632 = vsel %vm534, 0.0, %v611
        %vm633 = vcmp.lt.s32.totalorder %v420, 12
        %vm634 = vcmp.lt.s32.totalorder %v421, 12
        %643 = vrot.lane.b32.xlu0 %v517, 76
        %v644 = vpop.permute.xlu0 %643
        %645 = vrot.lane.b32.xlu0 %v529, 76
        %v646 = vpop.permute.xlu0 %645
        %647 = vrot.lane.b32.xlu0 %v518, 76
        %v648 = vpop.permute.xlu0 %647
        %649 = vrot.lane.b32.xlu0 %v530, 76
        %v650 = vpop.permute.xlu0 %649
        %651 = vrot.lane.b32.xlu0 %v519, 76
        %v652 = vpop.permute.xlu0 %651
        %653 = vrot.lane.b32.xlu0 %v531, 76
        %v654 = vpop.permute.xlu0 %653
        %655 = vrot.lane.b32.xlu0 %v520, 76
        %v656 = vpop.permute.xlu0 %655
        %657 = vrot.lane.b32.xlu0 %v532, 76
        %v658 = vpop.permute.xlu0 %657
        %vm659 = vcmask 621568
        %v660 = vsel %vm659, %v644, %v646
        %v661 = vsel %vm659, %v648, %v650
        %v662 = vsel %vm659, %v652, %v654
        %v663 = vsel %vm659, %v656, %v658
        %v672 = vsub.f32 %v408, %v660
        %v673 = vsub.f32 %v409, %v646
        %v674 = vsub.f32 %v410, %v661
        %v675 = vsub.f32 %v411, %v650
        %v676 = vsub.f32 %v412, %v662
        %v677 = vsub.f32 %v413, %v654
        %v678 = vsub.f32 %v414, %v663
        %v679 = vsub.f32 %v415, %v658
        %v680 = vmul.f32 %v672, 128.0
        %v681 = vmul.f32 %v673, 128.0
        %v682 = vmul.f32 %v674, 128.0
        %v683 = vmul.f32 %v675, 128.0
        %v684 = vmul.f32 %v676, 128.0
        %v685 = vmul.f32 %v677, 128.0
        %v686 = vmul.f32 %v678, 128.0
        %v687 = vmul.f32 %v679, 128.0
        %v688 = vsel %vm633, 0.0, %v680
        %v689 = vsel %vm634, 0.0, %v681
        %v690 = vsel %vm633, 0.0, %v682
        %v691 = vsel %vm634, 0.0, %v683
        %v692 = vsel %vm633, 0.0, %v684
        %v693 = vsel %vm634, 0.0, %v685
        %v694 = vsel %vm633, 0.0, %v686
        %v695 = vsel %vm634, 0.0, %v687
        %v696 = vld [vmem:[%s337] sm:$0xff]
        %v697 = vld [vmem:[%s337 + $0x8] sm:$0xff]
        %v698 = vld [vmem:[%s337 + $0x10] sm:$0xff]
        %v699 = vld [vmem:[%s337 + $0x18] sm:$0xff]
        %v700 = vld [vmem:[%s337 + $0x20] sm:$0xff]
        %v701 = vld [vmem:[%s337 + $0x28] sm:$0xff]
        %v702 = vld [vmem:[%s337 + $0x30] sm:$0xff]
        %v703 = vld [vmem:[%s337 + $0x38] sm:$0xff]
        %v704 = vmul.f32 %v474, %v696
        %v705 = vmul.f32 %v475, %v697
        %v706 = vmul.f32 %v476, %v698
        %v707 = vmul.f32 %v477, %v699
        %v708 = vmul.f32 %v478, %v700
        %v709 = vmul.f32 %v479, %v701
        %v710 = vmul.f32 %v480, %v702
        %v711 = vmul.f32 %v481, %v703
        %v712 = vld [vmem:[%s328] sm:$0xff]
        %v713 = vld [vmem:[%s328 + $0x8] sm:$0xff]
        %v714 = vld [vmem:[%s328 + $0x10] sm:$0xff]
        %v715 = vld [vmem:[%s328 + $0x18] sm:$0xff]
        %v716 = vld [vmem:[%s328 + $0x20] sm:$0xff]
        %v717 = vld [vmem:[%s328 + $0x28] sm:$0xff]
        %v718 = vld [vmem:[%s328 + $0x30] sm:$0xff]
        %v719 = vld [vmem:[%s328 + $0x38] sm:$0xff]
        %v720 = vmul.f32 %v500, %v712
        %v721 = vmul.f32 %v501, %v713
        %v722 = vmul.f32 %v502, %v714
        %v723 = vmul.f32 %v503, %v715
        %v724 = vmul.f32 %v504, %v716
        %v725 = vmul.f32 %v505, %v717
        %v726 = vmul.f32 %v506, %v718
        %v727 = vmul.f32 %v507, %v719
        %v728 = vsub.f32 %v704, %v720
        %v729 = vsub.f32 %v705, %v721
        %v730 = vsub.f32 %v706, %v722
        %v731 = vsub.f32 %v707, %v723
        %v732 = vsub.f32 %v708, %v724
        %v733 = vsub.f32 %v709, %v725
        %v734 = vsub.f32 %v710, %v726
        %v735 = vsub.f32 %v711, %v727
        %v736 = vld [vmem:[%s355] sm:$0xff]
        %v737 = vld [vmem:[%s355 + $0x8] sm:$0xff]
        %v738 = vld [vmem:[%s355 + $0x10] sm:$0xff]
        %v739 = vld [vmem:[%s355 + $0x18] sm:$0xff]
        %v740 = vld [vmem:[%s355 + $0x20] sm:$0xff]
        %v741 = vld [vmem:[%s355 + $0x28] sm:$0xff]
        %v742 = vld [vmem:[%s355 + $0x30] sm:$0xff]
        %v743 = vld [vmem:[%s355 + $0x38] sm:$0xff]
        %v744 = vmul.f32 %v625, %v736
        %v745 = vmul.f32 %v626, %v737
        %v746 = vmul.f32 %v627, %v738
        %v747 = vmul.f32 %v628, %v739
        %v748 = vmul.f32 %v629, %v740
        %v749 = vmul.f32 %v630, %v741
        %v750 = vmul.f32 %v631, %v742
        %v751 = vmul.f32 %v632, %v743
        %v752 = vadd.f32 %v728, %v744
        %v753 = vadd.f32 %v729, %v745
        %v754 = vadd.f32 %v730, %v746
        %v755 = vadd.f32 %v731, %v747
        %v756 = vadd.f32 %v732, %v748
        %v757 = vadd.f32 %v733, %v749
        %v758 = vadd.f32 %v734, %v750
        %v759 = vadd.f32 %v735, %v751
        %v760 = vld [vmem:[%s346] sm:$0xff]
        %v761 = vld [vmem:[%s346 + $0x8] sm:$0xff]
        %v762 = vld [vmem:[%s346 + $0x10] sm:$0xff]
        %v763 = vld [vmem:[%s346 + $0x18] sm:$0xff]
        %v764 = vld [vmem:[%s346 + $0x20] sm:$0xff]
        %v765 = vld [vmem:[%s346 + $0x28] sm:$0xff]
        %v766 = vld [vmem:[%s346 + $0x30] sm:$0xff]
        %v767 = vld [vmem:[%s346 + $0x38] sm:$0xff]
        %v768 = vmul.f32 %v688, %v760
        %v769 = vmul.f32 %v689, %v761
        %v770 = vmul.f32 %v690, %v762
        %v771 = vmul.f32 %v691, %v763
        %v772 = vmul.f32 %v692, %v764
        %v773 = vmul.f32 %v693, %v765
        %v774 = vmul.f32 %v694, %v766
        %v775 = vmul.f32 %v695, %v767
        %v776 = vsub.f32 %v752, %v768
        %v777 = vsub.f32 %v753, %v769
        %v778 = vsub.f32 %v754, %v770
        %v779 = vsub.f32 %v755, %v771
        %v780 = vsub.f32 %v756, %v772
        %v781 = vsub.f32 %v757, %v773
        %v782 = vsub.f32 %v758, %v774
        %v783 = vsub.f32 %v759, %v775
        %784 = vst [vmem:[%s401] sm:$0xff] %v776
        %vm785 = vcmask 523264
        %786 = vst.msk [vmem:[%s401 + $0x8] sm:$0xff] %vm785, %v777
        %787 = vst [vmem:[%s401 + $0x10] sm:$0xff] %v778
        %788 = vst.msk [vmem:[%s401 + $0x18] sm:$0xff] %vm785, %v779
        %789 = vst [vmem:[%s401 + $0x20] sm:$0xff] %v780
        %790 = vst.msk [vmem:[%s401 + $0x28] sm:$0xff] %vm785, %v781
        %791 = vst [vmem:[%s401 + $0x30] sm:$0xff] %v782
        %792 = vst.msk [vmem:[%s401 + $0x38] sm:$0xff] %vm785, %v783
        %s793 = sand.u32 %s166, 1
        %s794 = scalar_lea.sflag [#allocation4], %s793
        %s795 = sand.u32 %s166, 1
        %s796 = smul.addr %s795, 64
        %s797 = scalar_lea.vmem [#allocation11], %s796
        // Predicated region
        $region61: #{tpu_custom_call.1} parent=39 // pred_check
          %p798 = pneg %p176
        $region62: #{tpu_custom_call.1} parent=39 // pred_check_branch
          %800 = sbr.rel (%p798) target = $region64
        $region63: #{tpu_custom_call.1} parent=39 // pred_region
          %s801 = smul.u32 2, %s28
          %s803 = ssub.s32 1024, 1024
          %804 = vsyncadd %s794, %s803
          %s805 = smul.addr %s801, 4
          %s806 = smul.addr %s805, 128
          %s807 = scalar_lea.hbm %s5, %s806
          %s808 = sshll.u32 %s797, 4
          %s809 = int_to_ptr.vmem [resolvable:$true] %s808
          %814 = dma.vmem_to_hbm [thread:$0]  %s809, 1024, %s807, %s794, 256, 256, 16
        $region64: #{tpu_custom_call.1} parent=39 // pred_fallthru
          _
      $region40: #{tpu_custom_call.1} parent=5 // pred_fallthru
        _
      %p815 = scmp.le.s32.totalorder 2, %s23
      // Predicated region
      $region65: #{tpu_custom_call.1} parent=5 // pred_check
        %p816 = pneg %p815
      $region66: #{tpu_custom_call.1} parent=5 // pred_check_branch
        %818 = sbr.rel (%p816) target = $region68
      $region67: #{tpu_custom_call.1} parent=5 // pred_region
        %s819 = ssub.s32 %s23, 2
        // Predicated region
        $region69: #{tpu_custom_call.1} parent=67 // pred_check
          %p820 = pneg %p182
        $region70: #{tpu_custom_call.1} parent=67 // pred_check_branch
          %822 = sbr.rel (%p820) target = $region72
        $region71: #{tpu_custom_call.1} parent=67 // pred_region
          %s823 = sand.u32 %s167, 1
          %s824 = scalar_lea.sflag [#allocation4], %s823
          %s825 = sand.u32 %s167, 1
          %s826 = smul.addr %s825, 64
          %s827 = scalar_lea.vmem [#allocation11], %s826
          %828 = dma.done %s824, 1024
        $region72: #{tpu_custom_call.1} parent=67 // pred_fallthru
          _
      $region68: #{tpu_custom_call.1} parent=5 // pred_fallthru
        _
    $region6: #{tpu_custom_call.1} parent=1 // loop_footer
      %s27 = sadd.s32 1, %s23
    $region7: #{tpu_custom_call.1} parent=1 // loop_footer_branch
      %22 = sbr.rel target = $region3
    $region8: #{tpu_custom_call.1} parent=1 // loop_exit
      _
    %829 = vsyncpa [#allocation3], 1
    %s830 = scalar_lea.sflag [#allocation3], 1
    %831 = vsyncpa %s830, 1
    %832 = vsyncpa [#allocation6], 1
    %s833 = scalar_lea.sflag [#allocation6], 1
    %834 = vsyncpa %s833, 1
    %835 = vsyncpa [#allocation9], 1
    %s836 = scalar_lea.sflag [#allocation9], 1
    %837 = vsyncpa %s836, 1
    %838 = vsyncpa [#allocation4], 1
    %s839 = scalar_lea.sflag [#allocation4], 1
    %840 = vsyncpa %s839, 1

</llo_original>
